<compile_context>
chip_gen: v5e
topology: v5e:2x2
jax: 0.10.0
libtpu: 0.0.40
codegen_flags: <defaults>
</compile_context>

<pallas_src>
import functools

import jax
import jax.numpy as jnp
from jax import lax
from jax.experimental import pallas as pl
from jax.experimental.pallas import tpu as pltpu

BN_EPS = 1e-5
LANE = 128                      # channel dims padded to multiples of the lane width
TM_MAX = 256                    # M tile for the GEMM kernels
VMEM_LIMIT = 32 * 1024 * 1024   # explicit scoped-VMEM budget (safe on v7x 64MiB physical)


def _round_up(x, m):
    return (x + m - 1) // m * m


def _choose_m_tiling(m_true, tm_max=TM_MAX):
    """Return (padded M, M tile) with tile divisible by 8 and dividing padded M."""
    mp8 = _round_up(m_true, 8)
    if mp8 <= tm_max:
        return mp8, mp8
    return _round_up(m_true, tm_max), tm_max


# ----------------------------- Pallas kernels ------------------------------ #

def _gemm_stats_kernel(x_ref, s_ref, b_ref, w_ref, y_ref, st_ref, *,
                       m_true, tm, fuse_input_act):
    """Pass-1 GEMM: (opt. input affine+ReLU) -> bf16 MXU matmul -> raw y + BN partials."""
    i = pl.program_id(0)
    x = x_ref[...]                                              # (tm, K) f32
    if fuse_input_act:
        # previous (depthwise) layer's BN + ReLU fused into this GEMM's input
        x = jnp.maximum(x * s_ref[...] + b_ref[...], 0.0)
    y = jnp.dot(x.astype(jnp.bfloat16), w_ref[...],
                preferred_element_type=jnp.float32)             # (tm, tn) f32
    y_ref[...] = y
    # BN batch statistics: mask out the zero-padded M rows, accumulate sum/sum^2
    rows = lax.broadcasted_iota(jnp.int32, (tm, 1), 0) + i * tm
    ym = jnp.where(rows < m_true, y, 0.0)
    st_ref[0, 0:1, :] = jnp.sum(ym, axis=0, keepdims=True)
    st_ref[0, 1:2, :] = jnp.sum(ym * ym, axis=0, keepdims=True)


def _bn_relu_kernel(y_ref, s_ref, b_ref, o_ref):
    """Pass-2: y * scale + shift -> ReLU -> bf16 activation."""
    o_ref[...] = jnp.maximum(y_ref[...] * s_ref[...] + b_ref[...],
                             0.0).astype(o_ref.dtype)


def _dw_stats_kernel(ph_ref, w_ref, y_ref, st_ref, *, stride, chunk, wo, hph):
    """Depthwise 3x3 conv: 9 contiguous taps from the phase-split block + BN partials."""
    r = pl.program_id(1)
    row0 = r * chunk
    w = w_ref[...].astype(jnp.float32)                          # (9, Cp), loaded once
    cp = w.shape[1]
    acc = jnp.zeros((chunk, wo, cp), jnp.float32)
    for kh in range(3):                                         # static 9-tap unroll
        for kw in range(3):
            p = (kh % stride) * stride + (kw % stride)          # phase index
            dh, dwo = kh // stride, kw // stride                # offsets inside phase
            tap = ph_ref[0, pl.ds(p * hph + row0 + dh, chunk), pl.ds(dwo, wo), :]
            wrow = w[kh * 3 + kw:kh * 3 + kw + 1, :]            # (1, Cp)
            acc = acc + tap.astype(jnp.float32) * wrow[None]    # (1, 1, Cp) broadcast
    y_ref[...] = acc[None]                                      # (1, chunk, wo, Cp)
    ssum = jnp.sum(acc, axis=(0, 1), keepdims=True).reshape(1, cp)
    ssq = jnp.sum(acc * acc, axis=(0, 1), keepdims=True).reshape(1, cp)
    st_ref[0, 0, 0:1, :] = ssum
    st_ref[0, 0, 1:2, :] = ssq


def _head_kernel(x_ref, w_ref, b_ref, o_ref):
    """AvgPool2d(7) (= mean over the 49 positions) + Linear."""
    x = x_ref[...].astype(jnp.float32)                          # (bn, 49, Cp)
    pooled = jnp.mean(x, axis=1)                                # (bn, Cp) f32
    o_ref[...] = (jnp.dot(pooled.astype(jnp.bfloat16), w_ref[...],
                          preferred_element_type=jnp.float32) + b_ref[...])


# ------------------------------ JAX glue ----------------------------------- #

def _bn_scale_shift(stats, count, gamma, beta):
    """Tiny cross-tile reduce of (sum, sum_sq) partials -> BN scale/shift (f32)."""
    st = stats.reshape(-1, 2, stats.shape[-1]).sum(axis=0)      # (2, Cp)
    mu = st[0] / count
    var = jnp.maximum(st[1] / count - mu * mu, 0.0)             # biased var (torch train)
    scale = gamma * lax.rsqrt(var + BN_EPS)                     # (1, Cp)
    shift = beta - mu * scale
    return scale.reshape(1, -1), shift.reshape(1, -1)


def _gemm_bn_pass1(x2d, w, gamma, beta, m_true, *, in_scale=None, in_shift=None):
    """Tiled GEMM + BN-stat pass. x2d: (m_true, K) f32, w: (K, Coutp) bf16."""
    k = x2d.shape[1]
    coutp = w.shape[1]
    mpad, tm = _choose_m_tiling(m_true)
    tn = min(256, coutp)
    if mpad != m_true:
        x2d = jnp.pad(x2d, ((0, mpad - m_true), (0, 0)))
    fuse = in_scale is not None
    if not fuse:
        in_scale = jnp.ones((1, k), jnp.float32)
        in_shift = jnp.zeros((1, k), jnp.float32)
    grid = (mpad // tm, coutp // tn)
    kern = functools.partial(_gemm_stats_kernel, m_true=m_true, tm=tm,
                             fuse_input_act=fuse)
    y, st = pl.pallas_call(
        kern,
        out_shape=(jax.ShapeDtypeStruct((mpad, coutp), jnp.float32),
                   jax.ShapeDtypeStruct((grid[0], 2, coutp), jnp.float32)),
        grid=grid,
        in_specs=[pl.BlockSpec((tm, k), lambda i, j: (i, 0)),
                  pl.BlockSpec((1, k), lambda i, j: (0, 0)),
                  pl.BlockSpec((1, k), lambda i, j: (0, 0)),
                  pl.BlockSpec((k, tn), lambda i, j: (0, j))],
        out_specs=(pl.BlockSpec((tm, tn), lambda i, j: (i, j)),
                   pl.BlockSpec((1, 2, tn), lambda i, j: (i, 0, j))),
        compiler_params=pltpu.CompilerParams(
            dimension_semantics=("parallel", "parallel"),
            vmem_limit_bytes=VMEM_LIMIT),
        cost_estimate=pl.CostEstimate(
            flops=2 * mpad * k * coutp,
            transcendentals=0,
            bytes_accessed=mpad * k * 4 + k * coutp * 2 + mpad * coutp * 4),
    )(x2d, in_scale, in_shift, w)
    scale, shift = _bn_scale_shift(st, m_true, gamma, beta)
    return y, scale, shift, (mpad, tm, tn)


def _bn_relu_apply(y, scale, shift, tm, tn):
    """Tiled normalize + ReLU pass; emits bf16 activations."""
    mpad, cp = y.shape
    grid = (mpad // tm, cp // tn)
    return pl.pallas_call(
        _bn_relu_kernel,
        out_shape=jax.ShapeDtypeStruct((mpad, cp), jnp.bfloat16),
        grid=grid,
        in_specs=[pl.BlockSpec((tm, tn), lambda i, j: (i, j)),
                  pl.BlockSpec((1, tn), lambda i, j: (0, j)),
                  pl.BlockSpec((1, tn), lambda i, j: (0, j))],
        out_specs=pl.BlockSpec((tm, tn), lambda i, j: (i, j)),
        compiler_params=pltpu.CompilerParams(
            dimension_semantics=("parallel", "parallel"),
            vmem_limit_bytes=VMEM_LIMIT),
        cost_estimate=pl.CostEstimate(
            flops=2 * mpad * cp, transcendentals=0,
            bytes_accessed=mpad * cp * 4 + mpad * cp * 2),
    )(y, scale, shift)


def _im2col_3x3(x, stride):
    """3x3/pad=1 im2col for the (small) init conv. x: (N, H, W, Cin) f32."""
    xp = jnp.pad(x, ((0, 0), (1, 1), (1, 1), (0, 0)))
    n, hp, wp, c = xp.shape
    ho = (hp - 3) // stride + 1
    wo = (wp - 3) // stride + 1
    cols = []
    for kh in range(3):
        for kw in range(3):
            tap = lax.slice(xp, (0, kh, kw, 0),
                            (n, kh + (ho - 1) * stride + 1,
                             kw + (wo - 1) * stride + 1, c),
                            (1, stride, stride, 1))
            cols.append(tap.reshape(n * ho * wo, c))
    return jnp.concatenate(cols, axis=-1), ho, wo               # (M, 9*Cin), (kh,kw,c) order


def _init_conv_block(x_nhwc, p):
    """Standard 3x3 stride-2 conv + BN + ReLU (im2col GEMM)."""
    n = x_nhwc.shape[0]
    xcol, ho, wo = _im2col_3x3(x_nhwc.astype(jnp.float32), stride=2)
    m_true = n * ho * wo
    y, scale, shift, (mpad, tm, tn) = _gemm_bn_pass1(
        xcol, p["w"], p["gamma"], p["beta"], m_true)
    act = _bn_relu_apply(y, scale, shift, tm, tn)               # (mpad, Coutp) bf16
    return act[:m_true].reshape(n, ho, wo, act.shape[1])


def _dw_conv_block(x_act, p, stride):
    """Depthwise 3x3 conv (pad=1). Returns raw conv output (M, Cp) f32 + BN scale/shift.

    The BN+ReLU is *not* applied here; it is fused into the following pointwise
    GEMM's input side, avoiding one HBM round trip of the intermediate tensor.
    """
    n, h, w_, cp = x_act.shape
    ho = (h - 1) // stride + 1
    wo = (w_ - 1) // stride + 1
    chunk = max(1, min(ho, 8, 256 // max(wo, 1)))               # keep acc small in vregs
    ho_pad = _round_up(ho, chunk)
    rc = ho_pad // chunk

    xpad = jnp.pad(x_act, ((0, 0), (1, 1), (1, 1), (0, 0)))
    if stride == 1:
        phases = xpad[:, None]                                  # (N, 1, H+2, W+2, Cp)
    else:
        # Phase decomposition: total bytes == input bytes (no 9x tap duplication),
        # and every tap of the strided conv becomes a contiguous slice of a phase.
        hp, wp = xpad.shape[1], xpad.shape[2]
        xpad = jnp.pad(xpad, ((0, 0), (0, hp % 2), (0, wp % 2), (0, 0)))
        phases = jnp.stack(
            [xpad[:, ph::2, pw::2, :] for ph in range(2) for pw in range(2)], axis=1)
    extra = ho_pad - ho
    if extra:
        phases = jnp.pad(phases, ((0, 0), (0, 0), (0, extra), (0, 0), (0, 0)))
    _, p_, hph, wph, _ = phases.shape
    phases = phases.reshape(n, p_ * hph, wph, cp)               # fold phase axis into rows

    kern = functools.partial(_dw_stats_kernel, stride=stride, chunk=chunk,
                             wo=wo, hph=hph)
    y, st = pl.pallas_call(
        kern,
        out_shape=(jax.ShapeDtypeStruct((n, ho_pad, wo, cp), jnp.float32),
                   jax.ShapeDtypeStruct((n, rc, 2, cp), jnp.float32)),
        grid=(n, rc),
        in_specs=[pl.BlockSpec((1, p_ * hph, wph, cp), lambda b, r: (b, 0, 0, 0)),
                  pl.BlockSpec((9, cp), lambda b, r: (0, 0))],
        out_specs=(pl.BlockSpec((1, chunk, wo, cp), lambda b, r: (b, r, 0, 0)),
                   pl.BlockSpec((1, 1, 2, cp), lambda b, r: (b, r, 0, 0))),
        compiler_params=pltpu.CompilerParams(
            dimension_semantics=("parallel", "parallel"),
            vmem_limit_bytes=VMEM_LIMIT),
        cost_estimate=pl.CostEstimate(
            flops=2 * 9 * n * ho_pad * wo * cp,
            transcendentals=0,
            bytes_accessed=phases.size * 2 + n * ho_pad * wo * cp * 4 + 9 * cp * 4),
    )(phases, p["w"])

    m_true = n * ho * wo
    scale, shift = _bn_scale_shift(st, m_true, p["gamma"], p["beta"])
    y2d = y[:, :ho].reshape(m_true, cp)
    return y2d, scale, shift, (n, ho, wo), m_true


def _pw_conv_block(y_dw2d, dw_scale, dw_shift, p, m_true, spatial):
    """Pointwise 1x1 conv + BN + ReLU; the previous dw BN+ReLU is fused on input."""
    n, ho, wo = spatial
    y, scale, shift, (mpad, tm, tn) = _gemm_bn_pass1(
        y_dw2d, p["w"], p["gamma"], p["beta"], m_true,
        in_scale=dw_scale, in_shift=dw_shift)
    act = _bn_relu_apply(y, scale, shift, tm, tn)               # (mpad, Coutp) bf16
    return act[:m_true].reshape(n, ho, wo, act.shape[1])


def _head(x_act, w, b, num_classes):
    """AvgPool2d(kernel_size=7) + flatten + Linear (fused, batch-tiled)."""
    n, h, w_, cp = x_act.shape
    assert h == 7 and w_ == 7, "MobileNetV1 head expects a 7x7 feature map"
    feats = x_act.reshape(n, h * w_, cp)
    bn_tile = 8
    npad = _round_up(n, bn_tile)
    if npad != n:
        feats = jnp.pad(feats, ((0, npad - n), (0, 0), (0, 0)))
    ncp = w.shape[1]
    out = pl.pallas_call(
        _head_kernel,
        out_shape=jax.ShapeDtypeStruct((npad, ncp), jnp.float32),
        grid=(npad // bn_tile,),
        in_specs=[pl.BlockSpec((bn_tile, h * w_, cp), lambda i: (i, 0, 0)),
                  pl.BlockSpec((cp, ncp), lambda i: (0, 0)),
                  pl.BlockSpec((1, ncp), lambda i: (0, 0))],
        out_specs=pl.BlockSpec((bn_tile, ncp), lambda i: (i, 0)),
        compiler_params=pltpu.CompilerParams(
            dimension_semantics=("parallel",),
            vmem_limit_bytes=VMEM_LIMIT),
        cost_estimate=pl.CostEstimate(
            flops=2 * npad * cp * ncp + npad * h * w_ * cp,
            transcendentals=0,
            bytes_accessed=npad * h * w_ * cp * 2 + cp * ncp * 2 + npad * ncp * 4),
    )(feats, w, b)
    return out[:n, :num_classes]


# --------------------------- parameter creation ----------------------------- #

def init_params(key, in_channels, channels, num_classes):
    """Kaiming-init parameters, pre-padded to lane-dense (multiple-of-128) channels."""
    keys = iter(jax.random.split(key, 256))

    def kaiming(k, shape, fan):
        return (jnp.sqrt(2.0 / fan) * jax.random.normal(k, shape)).astype(jnp.float32)

    init_c = channels[0][0]
    init_cp = _round_up(init_c, LANE)
    w0 = kaiming(next(keys), (3, 3, in_channels, init_c), init_c * 9)  # fan_out
    w0 = w0.reshape(9 * in_channels, init_c)
    w0 = jnp.pad(w0, ((0, 0), (0, init_cp - init_c))).astype(jnp.bfloat16)
    params = {"init_block": {"w": w0,
                             "gamma": jnp.ones((1, init_cp), jnp.float32),
                             "beta": jnp.zeros((1, init_cp), jnp.float32)}}

    stages = []
    cin, cinp = init_c, init_cp
    for i, stage_ch in enumerate(channels[1:]):
        units = []
        for j, cout in enumerate(stage_ch):
            coutp = _round_up(cout, LANE)
            stride = 2 if (j == 0 and i != 0) else 1
            wdw = kaiming(next(keys), (3, 3, cin), 9).reshape(9, cin)   # fan_in = 9
            wdw = jnp.pad(wdw, ((0, 0), (0, cinp - cin)))
            wpw = kaiming(next(keys), (cin, cout), cout)                # fan_out = Cout
            wpw = jnp.pad(wpw, ((0, cinp - cin), (0, coutp - cout))).astype(jnp.bfloat16)
            units.append({
                "stride": stride,
                "dw": {"w": wdw,
                       "gamma": jnp.ones((1, cinp), jnp.float32),
                       "beta": jnp.zeros((1, cinp), jnp.float32)},
                "pw": {"w": wpw,
                       "gamma": jnp.ones((1, coutp), jnp.float32),
                       "beta": jnp.zeros((1, coutp), jnp.float32)},
            })
            cin, cinp = cout, coutp
        stages.append(units)
    params["stages"] = stages

    ncp = _round_up(num_classes, LANE)
    wout = kaiming(next(keys), (cin, num_classes), num_classes)         # fan_out
    params["output"] = {
        "w": jnp.pad(wout, ((0, cinp - cin), (0, ncp - num_classes))).astype(jnp.bfloat16),
        "b": jnp.zeros((1, ncp), jnp.float32),
        "num_classes": num_classes,
    }
    return params


# ------------------------------ forward pass -------------------------------- #

def mobilenet_v1_forward(params, pixel_values, labels=None):
    # pixel_values: NCHW (PyTorch convention) -> NHWC internally.
    x = jnp.transpose(pixel_values, (0, 2, 3, 1)).astype(jnp.float32)
    x = _init_conv_block(x, params["init_block"])               # (N, H, W, Cp) bf16
    for stage in params["stages"]:
        for unit in stage:
            y2d, s, b, spatial, m_true = _dw_conv_block(x, unit["dw"], unit["stride"])
            x = _pw_conv_block(y2d, s, b, unit["pw"], m_true, spatial)
    out = params["output"]
    logits = _head(x, out["w"], out["b"], out["num_classes"])
    loss = None
    if labels is not None:
        # CrossEntropyLoss (plain JAX; tiny, not a Pallas hot path).
        logp = jax.nn.log_softmax(logits, axis=-1)
        loss = -jnp.mean(jnp.take_along_axis(logp, labels.reshape(-1, 1), axis=-1))
    return loss, logits


# ---------------------------------- main ------------------------------------ #

if __name__ == "__main__":
    # Small MobileNetV1-style config: in_size 28x28 so the final feature map is
    # 7x7 (28 -> /2 init -> 14 -> stage1 stride1 -> 14 -> stage2 stride2 -> 7),
    # matching the fixed AvgPool2d(kernel_size=7).
    config = {
        "in_size": (28, 28),
        "in_channels": 4,
        "channels": [[8], [16], [32, 32]],
        "num_classes": 10,
    }
    batch = 2

    key = jax.random.PRNGKey(0)
    pkey, xkey = jax.random.split(key)
    params = init_params(pkey, config["in_channels"], config["channels"],
                         config["num_classes"])
    pixel_values = jax.random.normal(
        xkey, (batch, config["in_channels"], *config["in_size"]), jnp.float32)

    loss, logits = mobilenet_v1_forward(params, pixel_values)
    logits = jax.block_until_ready(logits)
    assert logits.shape == (batch, config["num_classes"])
    assert loss is None
    print("KERNEL_OK")
</pallas_src>

<mosaic_0001>
module attributes {stable_mosaic.version = 11 : i64} {
  func.func @_gemm_stats_kernel(%arg0: i32, %arg1: i32, %arg2: memref<256x36xf32, #tpu.memory_space<vmem>>, %arg3: memref<1x36xf32, #tpu.memory_space<vmem>>, %arg4: memref<1x36xf32, #tpu.memory_space<vmem>>, %arg5: memref<36x128xbf16, #tpu.memory_space<vmem>>, %arg6: memref<256x128xf32, #tpu.memory_space<vmem>>, %arg7: memref<1x2x128xf32, #tpu.memory_space<vmem>>) attributes {dimension_semantics = [#tpu.dimension_semantics<parallel>, #tpu.dimension_semantics<parallel>], iteration_bounds = array<i64: 2, 1>, scalar_prefetch = 0 : i64, scratch_operands = 0 : i64, tpu.core_type = #tpu.core_type<tc>, window_params = [{transform_indices = @transform_0, window_bounds = array<i64: 256, 36>}, {pipeline_mode = #tpu.pipeline_mode<synchronous>, transform_indices = @transform_1, window_bounds = array<i64: 1, 36>}, {pipeline_mode = #tpu.pipeline_mode<synchronous>, transform_indices = @transform_2, window_bounds = array<i64: 1, 36>}, {transform_indices = @transform_3, window_bounds = array<i64: 36, 128>}, {transform_indices = @transform_4, window_bounds = array<i64: 256, 128>}, {transform_indices = @transform_5, window_bounds = array<i64: 1, 2, 128>}]} {
    %c0 = arith.constant 0 : index
    %c0_0 = arith.constant 0 : index
    %0 = vector.load %arg2[%c0, %c0_0] : memref<256x36xf32, #tpu.memory_space<vmem>>, vector<256x36xf32>
    %1 = arith.truncf %0 : vector<256x36xf32> to vector<256x36xbf16>
    %c0_1 = arith.constant 0 : index
    %c0_2 = arith.constant 0 : index
    %2 = vector.load %arg5[%c0_1, %c0_2] : memref<36x128xbf16, #tpu.memory_space<vmem>>, vector<36x128xbf16>
    %cst = arith.constant dense<0.000000e+00> : vector<256x128xf32>
    %3 = tpu.matmul %1, %2, %cst {dimension_numbers = #tpu.dot_dimension_numbers<[1], [0], [0], [1], [0, 0, 1, 1], [], []>} : vector<256x36xbf16>, vector<36x128xbf16>, vector<256x128xf32> -> vector<256x128xf32>
    %c0_3 = arith.constant 0 : index
    %c0_4 = arith.constant 0 : index
    %4 = vector.load %arg6[%c0_3, %c0_4] : memref<256x128xf32, #tpu.memory_space<vmem>>, vector<256x128xf32>
    tpu.vector_store %arg6[%c0_3, %c0_4], %3 {strides = array<i32>} : memref<256x128xf32, #tpu.memory_space<vmem>>, vector<256x128xf32>,
    %5 = tpu.iota {dimensions = array<i32: 0>} : vector<256x1xi32>
    %c256_i32 = arith.constant 256 : i32
    %6 = arith.muli %arg0, %c256_i32 : i32
    %7 = vector.broadcast %6 : i32 to vector<256x1xi32>
    %8 = arith.addi %5, %7 : vector<256x1xi32>
    %c392_i32 = arith.constant 392 : i32
    %9 = vector.broadcast %c392_i32 : i32 to vector<256x1xi32>
    %10 = arith.cmpi slt, %8, %9 : vector<256x1xi32>
    %cst_5 = arith.constant 0.000000e+00 : f32
    %11 = vector.shape_cast %10 : vector<256x1xi1> to vector<256x1xi1>
    %12 = vector.broadcast %11 : vector<256x1xi1> to vector<256x128xi1>
    %13 = vector.broadcast %cst_5 : f32 to vector<256x128xf32>
    %14 = arith.select %12, %3, %13 : vector<256x128xi1>, vector<256x128xf32>
    %cst_6 = arith.constant dense<0.000000e+00> : vector<128xf32>
    %15 = vector.multi_reduction <add>, %14, %cst_6 [0] : vector<256x128xf32> to vector<128xf32>
    %16 = vector.shape_cast %15 : vector<128xf32> to vector<1x128xf32>
    %c0_7 = arith.constant 0 : index
    %c0_8 = arith.constant 0 : index
    %c0_9 = arith.constant 0 : index
    %17 = vector.load %arg7[%c0_7, %c0_8, %c0_9] : memref<1x2x128xf32, #tpu.memory_space<vmem>>, vector<1x1x128xf32>
    %18 = vector.shape_cast %17 : vector<1x1x128xf32> to vector<1x128xf32>
    %19 = vector.shape_cast %16 : vector<1x128xf32> to vector<1x1x128xf32>
    tpu.vector_store %arg7[%c0_7, %c0_8, %c0_9], %19 {strides = array<i32>} : memref<1x2x128xf32, #tpu.memory_space<vmem>>, vector<1x1x128xf32>,
    %20 = arith.mulf %14, %14 : vector<256x128xf32>
    %cst_10 = arith.constant dense<0.000000e+00> : vector<128xf32>
    %21 = vector.multi_reduction <add>, %20, %cst_10 [0] : vector<256x128xf32> to vector<128xf32>
    %22 = vector.shape_cast %21 : vector<128xf32> to vector<1x128xf32>
    %c0_11 = arith.constant 0 : index
    %c1 = arith.constant 1 : index
    %c0_12 = arith.constant 0 : index
    %23 = vector.load %arg7[%c0_11, %c1, %c0_12] : memref<1x2x128xf32, #tpu.memory_space<vmem>>, vector<1x1x128xf32>
    %24 = vector.shape_cast %23 : vector<1x1x128xf32> to vector<1x128xf32>
    %25 = vector.shape_cast %22 : vector<1x128xf32> to vector<1x1x128xf32>
    tpu.vector_store %arg7[%c0_11, %c1, %c0_12], %25 {strides = array<i32>} : memref<1x2x128xf32, #tpu.memory_space<vmem>>, vector<1x1x128xf32>,
    return
  }
  func.func @transform_0(%arg0: i32, %arg1: i32) -> (i32, i32) {
    %c0_i32 = arith.constant 0 : i32
    %c0_i32_0 = arith.constant 0 : i32
    return %arg0, %c0_i32 : i32, i32
  }
  func.func @transform_1(%arg0: i32, %arg1: i32) -> (i32, i32) {
    %c0_i32 = arith.constant 0 : i32
    %c0_i32_0 = arith.constant 0 : i32
    %c0_i32_1 = arith.constant 0 : i32
    return %c0_i32, %c0_i32_0 : i32, i32
  }
  func.func @transform_2(%arg0: i32, %arg1: i32) -> (i32, i32) {
    %c0_i32 = arith.constant 0 : i32
    %c0_i32_0 = arith.constant 0 : i32
    %c0_i32_1 = arith.constant 0 : i32
    return %c0_i32, %c0_i32_0 : i32, i32
  }
  func.func @transform_3(%arg0: i32, %arg1: i32) -> (i32, i32) {
    %c0_i32 = arith.constant 0 : i32
    %c0_i32_0 = arith.constant 0 : i32
    return %c0_i32, %arg1 : i32, i32
  }
  func.func @transform_4(%arg0: i32, %arg1: i32) -> (i32, i32) {
    %c0_i32 = arith.constant 0 : i32
    return %arg0, %arg1 : i32, i32
  }
  func.func @transform_5(%arg0: i32, %arg1: i32) -> (i32, i32, i32) {
    %c0_i32 = arith.constant 0 : i32
    %c0_i32_0 = arith.constant 0 : i32
    return %arg0, %c0_i32, %arg1 : i32, i32, i32
  }
}

</mosaic_0001>

<llo_original>
// kernel: tpu_custom_call.1
$region0: #{tpu_custom_call.1}
  #allocation0 [shape = 'u32[]', space=smem, size = 0x4, offset = 0x4, fixed_abs, tag = 'smem constant byte address 0x4 - core index']
  #allocation1 [shape = 'u32[72,128]{1,0:T(1,128)}', space=vmem, size = 0x9000, scoped, tag = 'internal scratch']
  %s0 = inlined_call_operand.vmem [shape: f32[512,36], index: 0, kind: input, shape index: {}]
  %s1 = inlined_call_operand.vmem [shape: f32[1,36], index: 1, kind: input, shape index: {}]
  %s2 = inlined_call_operand.vmem [shape: f32[1,36], index: 2, kind: input, shape index: {}]
  %s3 = inlined_call_operand.vmem [shape: bf16[36,128], index: 3, kind: input, shape index: {}]
  %s4 = inlined_call_operand.hbm [shape: f32[512,128], index: 4, kind: output, shape index: {0}]
  %s5 = inlined_call_operand.hbm [shape: f32[2,2,128], index: 5, kind: output, shape index: {1}]
  %6 = xla_tuple %s4, %s5
  %s7 = sld [smem:[#allocation0]]
  $region57: #{tpu_custom_call.1} parent=0
    _
  %s9 = ssub.s32 1, %s7
  %s10 = scalar_select 0, %s9, %s7
  $region1: #{tpu_custom_call.1} parent=0
    #allocation2 [shape = 'u8[262144]{0}', space=vmem, size = 0x40000, scoped, tag = 'output window, operand 0']
    #allocation3 [shape = 's32[2]{0}', space=sflag, size = 0x8, scoped, tag = 'scoped memory for tpu_custom_call.1']
    #allocation4 [shape = 'u8[2048]{0}', space=vmem, size = 0x800, scoped, tag = 'output window, operand 1']
    #allocation5 [shape = 's32[2]{0}', space=sflag, size = 0x8, scoped, tag = 'scoped memory for tpu_custom_call.1']
    %11 = vsyncpa [#allocation3], 0
    %s12 = scalar_lea.sflag [#allocation3], 1
    %13 = vsyncpa %s12, 0
    %14 = vsyncpa [#allocation5], 0
    %s15 = scalar_lea.sflag [#allocation5], 1
    %16 = vsyncpa %s15, 0
    loop: start=0, step=1, limit=4
    $region2: #{tpu_custom_call.1} parent=1 // loop_pre_header
      _
    $region3: #{tpu_custom_call.1} parent=1 // loop_header
      %s18 = sphi 0, %s22
      %p19 = scmp.ge.s32.totalorder %s18, 4
      %s25 = sphi 0, %s37
      %s26 = sphi 0, %s33
      %s27 = sphi 0, %s25
      %s28 = sphi 0, %s26
      %s29 = sphi 0, %s27
      %s30 = sphi 0, %s28
      %s40 = sphi 0, %s42
      %s43 = sphi 0, %s40
      %s44 = sphi 0, %s43
      %s60 = sphi 0, %s44
      %s64 = sphi 0, %s64
      %s66 = sphi 0, %s64
      %s67 = sphi 0, %s66
      %s81 = sphi 0, %s67
      %s85 = sphi 0, %s85
      %s87 = sphi 0, %s85
      %s88 = sphi 0, %s87
      %s102 = sphi 0, %s88
      %s108 = sphi 0, %s110
      %s111 = sphi 0, %s108
      %s112 = sphi 0, %s111
      %s128 = sphi 0, %s112
      %s136 = sphi 0, %s138
      %s139 = sphi 0, %s136
      %s140 = sphi 0, %s139
      %s156 = sphi 0, %s140
      %s164 = sphi 0, %s166
      %s167 = sphi 0, %s164
      %s168 = sphi 0, %s167
      %s184 = sphi 0, %s168
    $region4: #{tpu_custom_call.1} parent=1 // loop_header_branch
      %21 = sbr.rel (%p19) target = $region8
    $region5: #{tpu_custom_call.1} parent=1 // loop_body
      %s23 = ssub.s32 %s18, 1
      %s24 = ssub.s32 %s18, 2
      %s31 = sadd.s32 1, %s26
      %p32 = scmp.ge.s32.totalorder %s31, 1
      %s33 = scalar_select %p32, 0, %s31
      %s34 = sadd.s32 1, %s25
      %s35 = scalar_select %p32, %s34, %s25
      %p36 = scmp.ge.s32.totalorder %s35, 2
      %s37 = scalar_select %p36, 0, %s35
      %s38 = ssub.s32 %s25, %s37
      %p39 = scmp.eq.s32.totalorder %s38, 0
      %s41 = sadd.s32 %s40, 1
      %s42 = scalar_select %p39, %s40, %s41
      %p45 = pneg %p39
      %p46 = scmp.eq.s32.totalorder %s18, 1
      %p47 = por %p45, %p46
      %p48 = scmp.ne.s32.totalorder %s40, %s43
      %p49 = scmp.eq.s32.totalorder %s18, 0
      %p50 = por %p48, %p49
      %p51 = scmp.ne.s32.totalorder %s40, %s43
      %p52 = scmp.eq.s32.totalorder %s23, 1
      %p53 = por %p51, %p52
      %p54 = scmp.ne.s32.totalorder %s43, %s44
      %p55 = scmp.eq.s32.totalorder %s23, 0
      %p56 = por %p54, %p55
      %p57 = scmp.ne.s32.totalorder %s43, %s44
      %p58 = scmp.eq.s32.totalorder %s24, 1
      %p59 = por %p57, %p58
      %p61 = scmp.ne.s32.totalorder %s44, %s60
      %p62 = scmp.eq.s32.totalorder %s24, 0
      %p63 = por %p61, %p62
      %s65 = sadd.s32 %s64, 1
      %p68 = scmp.eq.s32.totalorder %s18, 1
      %p69 = scmp.ne.s32.totalorder %s64, %s66
      %p70 = scmp.eq.s32.totalorder %s18, 0
      %p71 = por %p69, %p70
      %p72 = scmp.ne.s32.totalorder %s64, %s66
      %p73 = scmp.eq.s32.totalorder %s23, 1
      %p74 = por %p72, %p73
      %p75 = scmp.ne.s32.totalorder %s66, %s67
      %p76 = scmp.eq.s32.totalorder %s23, 0
      %p77 = por %p75, %p76
      %p78 = scmp.ne.s32.totalorder %s66, %s67
      %p79 = scmp.eq.s32.totalorder %s24, 1
      %p80 = por %p78, %p79
      %p82 = scmp.ne.s32.totalorder %s67, %s81
      %p83 = scmp.eq.s32.totalorder %s24, 0
      %p84 = por %p82, %p83
      %s86 = sadd.s32 %s85, 1
      %p89 = scmp.eq.s32.totalorder %s18, 1
      %p90 = scmp.ne.s32.totalorder %s85, %s87
      %p91 = scmp.eq.s32.totalorder %s18, 0
      %p92 = por %p90, %p91
      %p93 = scmp.ne.s32.totalorder %s85, %s87
      %p94 = scmp.eq.s32.totalorder %s23, 1
      %p95 = por %p93, %p94
      %p96 = scmp.ne.s32.totalorder %s87, %s88
      %p97 = scmp.eq.s32.totalorder %s23, 0
      %p98 = por %p96, %p97
      %p99 = scmp.ne.s32.totalorder %s87, %s88
      %p100 = scmp.eq.s32.totalorder %s24, 1
      %p101 = por %p99, %p100
      %p103 = scmp.ne.s32.totalorder %s88, %s102
      %p104 = scmp.eq.s32.totalorder %s24, 0
      %p105 = por %p103, %p104
      %s106 = ssub.s32 %s26, %s33
      %p107 = scmp.eq.s32.totalorder %s106, 0
      %s109 = sadd.s32 %s108, 1
      %s110 = scalar_select %p107, %s108, %s109
      %p113 = pneg %p107
      %p114 = scmp.eq.s32.totalorder %s18, 1
      %p115 = por %p113, %p114
      %p116 = scmp.ne.s32.totalorder %s108, %s111
      %p117 = scmp.eq.s32.totalorder %s18, 0
      %p118 = por %p116, %p117
      %p119 = scmp.ne.s32.totalorder %s108, %s111
      %p120 = scmp.eq.s32.totalorder %s23, 1
      %p121 = por %p119, %p120
      %p122 = scmp.ne.s32.totalorder %s111, %s112
      %p123 = scmp.eq.s32.totalorder %s23, 0
      %p124 = por %p122, %p123
      %p125 = scmp.ne.s32.totalorder %s111, %s112
      %p126 = scmp.eq.s32.totalorder %s24, 1
      %p127 = por %p125, %p126
      %p129 = scmp.ne.s32.totalorder %s112, %s128
      %p130 = scmp.eq.s32.totalorder %s24, 0
      %p131 = por %p129, %p130
      %s132 = ssub.s32 %s25, %s37
      %s133 = ssub.s32 %s26, %s33
      %s134 = sor.u32 %s132, %s133
      %p135 = scmp.eq.s32.totalorder %s134, 0
      %s137 = sadd.s32 %s136, 1
      %s138 = scalar_select %p135, %s136, %s137
      %p141 = pneg %p135
      %p142 = scmp.eq.s32.totalorder %s18, 1
      %p143 = por %p141, %p142
      %p144 = scmp.ne.s32.totalorder %s136, %s139
      %p145 = scmp.eq.s32.totalorder %s18, 0
      %p146 = por %p144, %p145
      %p147 = scmp.ne.s32.totalorder %s136, %s139
      %p148 = scmp.eq.s32.totalorder %s23, 1
      %p149 = por %p147, %p148
      %p150 = scmp.ne.s32.totalorder %s139, %s140
      %p151 = scmp.eq.s32.totalorder %s23, 0
      %p152 = por %p150, %p151
      %p153 = scmp.ne.s32.totalorder %s139, %s140
      %p154 = scmp.eq.s32.totalorder %s24, 1
      %p155 = por %p153, %p154
      %p157 = scmp.ne.s32.totalorder %s140, %s156
      %p158 = scmp.eq.s32.totalorder %s24, 0
      %p159 = por %p157, %p158
      %s160 = ssub.s32 %s25, %s37
      %s161 = ssub.s32 %s26, %s33
      %s162 = sor.u32 %s160, %s161
      %p163 = scmp.eq.s32.totalorder %s162, 0
      %s165 = sadd.s32 %s164, 1
      %s166 = scalar_select %p163, %s164, %s165
      %p169 = pneg %p163
      %p170 = scmp.eq.s32.totalorder %s18, 1
      %p171 = por %p169, %p170
      %p172 = scmp.ne.s32.totalorder %s164, %s167
      %p173 = scmp.eq.s32.totalorder %s18, 0
      %p174 = por %p172, %p173
      %p175 = scmp.ne.s32.totalorder %s164, %s167
      %p176 = scmp.eq.s32.totalorder %s23, 1
      %p177 = por %p175, %p176
      %p178 = scmp.ne.s32.totalorder %s167, %s168
      %p179 = scmp.eq.s32.totalorder %s23, 0
      %p180 = por %p178, %p179
      %p181 = scmp.ne.s32.totalorder %s167, %s168
      %p182 = scmp.eq.s32.totalorder %s24, 1
      %p183 = por %p181, %p182
      %p185 = scmp.ne.s32.totalorder %s168, %s184
      %p186 = scmp.eq.s32.totalorder %s24, 0
      %p187 = por %p185, %p186
      %p188 = scmp.le.s32.totalorder 1, %s18
      %p189 = scmp.lt.s32.totalorder %s18, 3
      %p190 = pnand %p188, %p189
      %p191 = pneg %p190
      // Predicated region
      $region9: #{tpu_custom_call.1} parent=5 // pred_check
        _
      $region10: #{tpu_custom_call.1} parent=5 // pred_check_branch
        %193 = sbr.rel (%p190) target = $region12
      $region11: #{tpu_custom_call.1} parent=5 // pred_region
        %s194 = ssub.s32 %s18, 1
        // Predicated region
        $region13: #{tpu_custom_call.1} parent=11 // pred_check
          %p195 = pneg %p77
        $region14: #{tpu_custom_call.1} parent=11 // pred_check_branch
          %197 = sbr.rel (%p195) target = $region16
        $region15: #{tpu_custom_call.1} parent=11 // pred_region
          _
        $region16: #{tpu_custom_call.1} parent=11 // pred_fallthru
          _
        // Predicated region
        $region17: #{tpu_custom_call.1} parent=11 // pred_check
          %p198 = pneg %p98
        $region18: #{tpu_custom_call.1} parent=11 // pred_check_branch
          %200 = sbr.rel (%p198) target = $region20
        $region19: #{tpu_custom_call.1} parent=11 // pred_region
          _
        $region20: #{tpu_custom_call.1} parent=11 // pred_fallthru
          _
        // Predicated region
        $region21: #{tpu_custom_call.1} parent=11 // pred_check
          %p201 = pneg %p124
        $region22: #{tpu_custom_call.1} parent=11 // pred_check_branch
          %203 = sbr.rel (%p201) target = $region24
        $region23: #{tpu_custom_call.1} parent=11 // pred_region
          %p204 = scmp.lt.s32.totalorder %s28, 0
          %s205 = scalar_select %p204, %s28, 0
          %s206 = smul.addr %s205, 4
          %s207 = scalar_lea.vmem %s3, %s206
        $region24: #{tpu_custom_call.1} parent=11 // pred_fallthru
          _
      $region12: #{tpu_custom_call.1} parent=5 // pred_fallthru
        _
      %p208 = scmp.lt.s32.totalorder %s18, 2
      // Predicated region
      $region25: #{tpu_custom_call.1} parent=5 // pred_check
        %p209 = pneg %p208
      $region26: #{tpu_custom_call.1} parent=5 // pred_check_branch
        %211 = sbr.rel (%p209) target = $region28
      $region27: #{tpu_custom_call.1} parent=5 // pred_region
        // Predicated region
        $region29: #{tpu_custom_call.1} parent=27 // pred_check
          %p212 = pneg %p50
        $region30: #{tpu_custom_call.1} parent=27 // pred_check_branch
          %214 = sbr.rel (%p212) target = $region32
        $region31: #{tpu_custom_call.1} parent=27 // pred_region
          %s215 = smul.u32 32, %s25
          %p216 = scmp.lt.s32.totalorder %s215, 63
          %s217 = scalar_select %p216, %s215, 63
          %s218 = smul.addr %s217, 8
          %s219 = scalar_lea.vmem %s0, %s218
          %s220 = smul.u32 32, %s25
        $region32: #{tpu_custom_call.1} parent=27 // pred_fallthru
          _
      $region28: #{tpu_custom_call.1} parent=5 // pred_fallthru
        _
      %p221 = scmp.le.s32.totalorder 1, %s18
      %p222 = scmp.lt.s32.totalorder %s18, 3
      %p223 = pnand %p221, %p222
      %p224 = pneg %p223
      // Predicated region
      $region33: #{tpu_custom_call.1} parent=5 // pred_check
        _
      $region34: #{tpu_custom_call.1} parent=5 // pred_check_branch
        %226 = sbr.rel (%p223) target = $region36
      $region35: #{tpu_custom_call.1} parent=5 // pred_region
        %s227 = ssub.s32 %s18, 1
        %s228 = smul.u32 32, %s27
        %p229 = scmp.lt.s32.totalorder %s228, 63
        %s230 = scalar_select %p229, %s228, 63
        %s231 = smul.addr %s230, 8
        %s232 = scalar_lea.vmem %s0, %s231
        %p233 = pneg %p56
        %p234 = pneg %p53
        %p235 = pneg %p77
        %p236 = pneg %p74
        %p237 = pneg %p98
        %p238 = pneg %p95
        %p239 = scmp.lt.s32.totalorder %s28, 0
        %s240 = scalar_select %p239, %s28, 0
        %s241 = smul.addr %s240, 4
        %s242 = scalar_lea.vmem %s3, %s241
        %p243 = pneg %p124
        %p244 = pneg %p121
        %p245 = pneg %p152
        %p246 = pneg %p149
        %s247 = sand.u32 %s139, 1
        %s248 = scalar_lea.sflag [#allocation3], %s247
        %s249 = sand.u32 %s139, 1
        %s250 = smul.addr %s249, 256
        %s251 = scalar_lea.vmem [#allocation2], %s250
        %p252 = pneg %p180
        %p253 = pneg %p177
        %s254 = sand.u32 %s167, 1
        %s255 = scalar_lea.sflag [#allocation5], %s254
        %s256 = sand.u32 %s167, 1
        %s257 = smul.addr %s256, 2
        %s258 = scalar_lea.vmem [#allocation4], %s257
        %s259 = smul.u32 32, %s27
        %p260 = scmp.lt.s32.totalorder %s259, 63
        %s261 = scalar_select %p260, %s259, 63
        %s262 = smul.addr %s261, 8
        %s263 = scalar_lea.vmem %s0, %s262
        %s264 = smul.u32 32, %s27
        %p265 = scmp.lt.s32.totalorder %s28, 0
        %s266 = scalar_select %p265, %s28, 0
        %s267 = smul.addr %s266, 4
        %s268 = scalar_lea.vmem %s3, %s267
        %s269 = smul.u32 32, %s27
        %v271 = vld [vmem:[%s263] sm:$0xff]
        %v272 = vld [vmem:[%s263 + $0x8] sm:$0xff]
        %v273 = vld [vmem:[%s263 + $0x10] sm:$0xff]
        %v274 = vld [vmem:[%s263 + $0x18] sm:$0xff]
        %v275 = vld [vmem:[%s263 + $0x20] sm:$0xff]
        %v276 = vld [vmem:[%s263 + $0x28] sm:$0xff]
        %v277 = vld [vmem:[%s263 + $0x30] sm:$0xff]
        %v278 = vld [vmem:[%s263 + $0x38] sm:$0xff]
        %v279 = vld [vmem:[%s263 + $0x40] sm:$0xff]
        %v280 = vld [vmem:[%s263 + $0x48] sm:$0xff]
        %v281 = vld [vmem:[%s263 + $0x50] sm:$0xff]
        %v282 = vld [vmem:[%s263 + $0x58] sm:$0xff]
        %v283 = vld [vmem:[%s263 + $0x60] sm:$0xff]
        %v284 = vld [vmem:[%s263 + $0x68] sm:$0xff]
        %v285 = vld [vmem:[%s263 + $0x70] sm:$0xff]
        %v286 = vld [vmem:[%s263 + $0x78] sm:$0xff]
        %v287 = vld [vmem:[%s263 + $0x80] sm:$0xff]
        %v288 = vld [vmem:[%s263 + $0x88] sm:$0xff]
        %v289 = vld [vmem:[%s263 + $0x90] sm:$0xff]
        %v290 = vld [vmem:[%s263 + $0x98] sm:$0xff]
        %v291 = vld [vmem:[%s263 + $0xa0] sm:$0xff]
        %v292 = vld [vmem:[%s263 + $0xa8] sm:$0xff]
        %v293 = vld [vmem:[%s263 + $0xb0] sm:$0xff]
        %v294 = vld [vmem:[%s263 + $0xb8] sm:$0xff]
        %v295 = vld [vmem:[%s263 + $0xc0] sm:$0xff]
        %v296 = vld [vmem:[%s263 + $0xc8] sm:$0xff]
        %v297 = vld [vmem:[%s263 + $0xd0] sm:$0xff]
        %v298 = vld [vmem:[%s263 + $0xd8] sm:$0xff]
        %v299 = vld [vmem:[%s263 + $0xe0] sm:$0xff]
        %v300 = vld [vmem:[%s263 + $0xe8] sm:$0xff]
        %v301 = vld [vmem:[%s263 + $0xf0] sm:$0xff]
        %v302 = vld [vmem:[%s263 + $0xf8] sm:$0xff]
        %v303 = vpack.c.bf16 %v272, %v271
        %v304 = vpack.c.bf16 %v274, %v273
        %v305 = vpack.c.bf16 %v276, %v275
        %v306 = vpack.c.bf16 %v278, %v277
        %v307 = vpack.c.bf16 %v280, %v279
        %v308 = vpack.c.bf16 %v282, %v281
        %v309 = vpack.c.bf16 %v284, %v283
        %v310 = vpack.c.bf16 %v286, %v285
        %v311 = vpack.c.bf16 %v288, %v287
        %v312 = vpack.c.bf16 %v290, %v289
        %v313 = vpack.c.bf16 %v292, %v291
        %v314 = vpack.c.bf16 %v294, %v293
        %v315 = vpack.c.bf16 %v296, %v295
        %v316 = vpack.c.bf16 %v298, %v297
        %v317 = vpack.c.bf16 %v300, %v299
        %v318 = vpack.c.bf16 %v302, %v301
        %v319 = vld [vmem:[%s268] sm:$0xf]
        %v320 = vld [vmem:[%s268 + $0x4] sm:$0xf]
        %v321 = vld [vmem:[%s268 + $0x8] sm:$0xf]
        %v322 = vld [vmem:[%s268 + $0xc] sm:$0xf]
        %v323 = vld [vmem:[%s268 + $0x10] sm:$0x3]
        %v329 = vunpack.c.l.b16 %v319
        %v330 = vunpack.c.l.b16 %v320
        %v331 = vunpack.c.l.b16 %v321
        %v332 = vunpack.c.l.b16 %v322
        %v333 = vunpack.c.l.b16 %v323
        %v334 = vpack.c.b16 %v330, %v329
        %v335 = vpack.c.b16 %v332, %v331
        %v336 = vpack.c.b16 %v333, %v333
        %vm339 = vcmask 293888
        %v341 = vsel %vm339, %v303, 0
        %v344 = vsel %vm339, %v304, 0
        %v347 = vsel %vm339, %v305, 0
        %v350 = vsel %vm339, %v306, 0
        %v353 = vsel %vm339, %v307, 0
        %v356 = vsel %vm339, %v308, 0
        %v359 = vsel %vm339, %v309, 0
        %v362 = vsel %vm339, %v310, 0
        %v365 = vsel %vm339, %v311, 0
        %v368 = vsel %vm339, %v312, 0
        %v371 = vsel %vm339, %v313, 0
        %v374 = vsel %vm339, %v314, 0
        %v377 = vsel %vm339, %v315, 0
        %v380 = vsel %vm339, %v316, 0
        %v383 = vsel %vm339, %v317, 0
        %v386 = vsel %vm339, %v318, 0
        %vm388 = vcmask 1041408
        %v390 = vsel %vm388, %v336, 0
        %392 = vmatpush.bf16.msra.mxu0 0
        %393 = vmatpush.bf16.msra.mxu0 0
        %394 = vmatpush.bf16.msra.mxu0 0
        %395 = vmatpush.bf16.msra.mxu0 0
        %396 = vmatpush.bf16.msra.mxu0 0
        %397 = vmatpush.bf16.msra.mxu0 %v390
        %398 = vmatpush.bf16.msra.mxu0 %v335
        %399 = vmatpush.bf16.msra.mxu0 %v334
        %400 = vmatmul.bf16.gmra.mxu0 %v341
        %v401 = vpop.f32.mrf.mxu0
        %v402 = vadd.f32 0.0, %v401
        %v403 = vpop.f32.mrf.mxu0
        %v404 = vadd.f32 0.0, %v403
        %405 = vmatmul.bf16.gmra.mxu0 %v344
        %v406 = vpop.f32.mrf.mxu0
        %v407 = vadd.f32 0.0, %v406
        %v408 = vpop.f32.mrf.mxu0
        %v409 = vadd.f32 0.0, %v408
        %410 = vmatmul.bf16.gmra.mxu0 %v347
        %v411 = vpop.f32.mrf.mxu0
        %v412 = vadd.f32 0.0, %v411
        %v413 = vpop.f32.mrf.mxu0
        %v414 = vadd.f32 0.0, %v413
        %415 = vmatmul.bf16.gmra.mxu0 %v350
        %v416 = vpop.f32.mrf.mxu0
        %v417 = vadd.f32 0.0, %v416
        %v418 = vpop.f32.mrf.mxu0
        %v419 = vadd.f32 0.0, %v418
        %420 = vmatmul.bf16.gmra.mxu0 %v353
        %v421 = vpop.f32.mrf.mxu0
        %v422 = vadd.f32 0.0, %v421
        %v423 = vpop.f32.mrf.mxu0
        %v424 = vadd.f32 0.0, %v423
        %425 = vmatmul.bf16.gmra.mxu0 %v356
        %v426 = vpop.f32.mrf.mxu0
        %v427 = vadd.f32 0.0, %v426
        %v428 = vpop.f32.mrf.mxu0
        %v429 = vadd.f32 0.0, %v428
        %430 = vmatmul.bf16.gmra.mxu0 %v359
        %v431 = vpop.f32.mrf.mxu0
        %v432 = vadd.f32 0.0, %v431
        %v433 = vpop.f32.mrf.mxu0
        %v434 = vadd.f32 0.0, %v433
        %435 = vmatmul.bf16.gmra.mxu0 %v362
        %v436 = vpop.f32.mrf.mxu0
        %v437 = vadd.f32 0.0, %v436
        %v438 = vpop.f32.mrf.mxu0
        %v439 = vadd.f32 0.0, %v438
        %440 = vmatmul.bf16.gmra.mxu0 %v365
        %v441 = vpop.f32.mrf.mxu0
        %v442 = vadd.f32 0.0, %v441
        %v443 = vpop.f32.mrf.mxu0
        %v444 = vadd.f32 0.0, %v443
        %445 = vmatmul.bf16.gmra.mxu0 %v368
        %v446 = vpop.f32.mrf.mxu0
        %v447 = vadd.f32 0.0, %v446
        %v448 = vpop.f32.mrf.mxu0
        %v449 = vadd.f32 0.0, %v448
        %450 = vmatmul.bf16.gmra.mxu0 %v371
        %v451 = vpop.f32.mrf.mxu0
        %v452 = vadd.f32 0.0, %v451
        %v453 = vpop.f32.mrf.mxu0
        %v454 = vadd.f32 0.0, %v453
        %455 = vmatmul.bf16.gmra.mxu0 %v374
        %v456 = vpop.f32.mrf.mxu0
        %v457 = vadd.f32 0.0, %v456
        %v458 = vpop.f32.mrf.mxu0
        %v459 = vadd.f32 0.0, %v458
        %460 = vmatmul.bf16.gmra.mxu0 %v377
        %v461 = vpop.f32.mrf.mxu0
        %v462 = vadd.f32 0.0, %v461
        %v463 = vpop.f32.mrf.mxu0
        %v464 = vadd.f32 0.0, %v463
        %465 = vmatmul.bf16.gmra.mxu0 %v380
        %v466 = vpop.f32.mrf.mxu0
        %v467 = vadd.f32 0.0, %v466
        %v468 = vpop.f32.mrf.mxu0
        %v469 = vadd.f32 0.0, %v468
        %470 = vmatmul.bf16.gmra.mxu0 %v383
        %v471 = vpop.f32.mrf.mxu0
        %v472 = vadd.f32 0.0, %v471
        %v473 = vpop.f32.mrf.mxu0
        %v474 = vadd.f32 0.0, %v473
        %475 = vmatmul.bf16.gmra.mxu0 %v386
        %v476 = vpop.f32.mrf.mxu0
        %v477 = vadd.f32 0.0, %v476
        %v478 = vpop.f32.mrf.mxu0
        %v479 = vadd.f32 0.0, %v478
        %480 = vdwg.mxu0
        %481 = vst [vmem:[%s251] sm:$0xff] %v402
        %482 = vst [vmem:[%s251 + $0x8] sm:$0xff] %v404
        %483 = vst [vmem:[%s251 + $0x10] sm:$0xff] %v407
        %484 = vst [vmem:[%s251 + $0x18] sm:$0xff] %v409
        %485 = vst [vmem:[%s251 + $0x20] sm:$0xff] %v412
        %486 = vst [vmem:[%s251 + $0x28] sm:$0xff] %v414
        %487 = vst [vmem:[%s251 + $0x30] sm:$0xff] %v417
        %488 = vst [vmem:[%s251 + $0x38] sm:$0xff] %v419
        %489 = vst [vmem:[%s251 + $0x40] sm:$0xff] %v422
        %490 = vst [vmem:[%s251 + $0x48] sm:$0xff] %v424
        %491 = vst [vmem:[%s251 + $0x50] sm:$0xff] %v427
        %492 = vst [vmem:[%s251 + $0x58] sm:$0xff] %v429
        %493 = vst [vmem:[%s251 + $0x60] sm:$0xff] %v432
        %494 = vst [vmem:[%s251 + $0x68] sm:$0xff] %v434
        %495 = vst [vmem:[%s251 + $0x70] sm:$0xff] %v437
        %496 = vst [vmem:[%s251 + $0x78] sm:$0xff] %v439
        %497 = vst [vmem:[%s251 + $0x80] sm:$0xff] %v442
        %498 = vst [vmem:[%s251 + $0x88] sm:$0xff] %v444
        %499 = vst [vmem:[%s251 + $0x90] sm:$0xff] %v447
        %500 = vst [vmem:[%s251 + $0x98] sm:$0xff] %v449
        %501 = vst [vmem:[%s251 + $0xa0] sm:$0xff] %v452
        %502 = vst [vmem:[%s251 + $0xa8] sm:$0xff] %v454
        %503 = vst [vmem:[%s251 + $0xb0] sm:$0xff] %v457
        %504 = vst [vmem:[%s251 + $0xb8] sm:$0xff] %v459
        %505 = vst [vmem:[%s251 + $0xc0] sm:$0xff] %v462
        %506 = vst [vmem:[%s251 + $0xc8] sm:$0xff] %v464
        %507 = vst [vmem:[%s251 + $0xd0] sm:$0xff] %v467
        %508 = vst [vmem:[%s251 + $0xd8] sm:$0xff] %v469
        %509 = vst [vmem:[%s251 + $0xe0] sm:$0xff] %v472
        %510 = vst [vmem:[%s251 + $0xe8] sm:$0xff] %v474
        %511 = vst [vmem:[%s251 + $0xf0] sm:$0xff] %v477
        %512 = vst [vmem:[%s251 + $0xf8] sm:$0xff] %v479
        %v513 = vlaneseq
        %v514 = vshrl.u32 %v513, 7
        %v515 = vadd.s32 %v514, 8
        %v516 = vadd.s32 %v514, 16
        %v517 = vadd.s32 %v514, 24
        %v518 = vadd.s32 %v514, 32
        %v519 = vadd.s32 %v514, 40
        %v520 = vadd.s32 %v514, 48
        %v521 = vadd.s32 %v514, 56
        %v522 = vadd.s32 %v514, 64
        %v523 = vadd.s32 %v514, 72
        %v524 = vadd.s32 %v514, 80
        %v525 = vadd.s32 %v514, 88
        %v526 = vadd.s32 %v514, 96
        %v527 = vadd.s32 %v514, 104
        %v528 = vadd.s32 %v514, 112
        %v529 = vadd.s32 %v514, 120
        %v530 = vadd.s32 %v514, 128
        %v531 = vadd.s32 %v514, 136
        %v532 = vadd.s32 %v514, 144
        %v533 = vadd.s32 %v514, 152
        %v534 = vadd.s32 %v514, 160
        %v535 = vadd.s32 %v514, 168
        %v536 = vadd.s32 %v514, 176
        %v537 = vadd.s32 %v514, 184
        %v538 = vadd.s32 %v514, 192
        %v539 = vadd.s32 %v514, 200
        %v540 = vadd.s32 %v514, 208
        %v541 = vadd.s32 %v514, 216
        %v542 = vadd.s32 %v514, 224
        %v543 = vadd.s32 %v514, 232
        %v544 = vadd.s32 %v514, 240
        %v545 = vadd.s32 %v514, 248
        %s546 = smul.u32 %s27, 256
        %v547 = vstv %s546
        %v548 = vadd.s32 %v514, %v547
        %v549 = vadd.s32 %v515, %v547
        %v550 = vadd.s32 %v516, %v547
        %v551 = vadd.s32 %v517, %v547
        %v552 = vadd.s32 %v518, %v547
        %v553 = vadd.s32 %v519, %v547
        %v554 = vadd.s32 %v520, %v547
        %v555 = vadd.s32 %v521, %v547
        %v556 = vadd.s32 %v522, %v547
        %v557 = vadd.s32 %v523, %v547
        %v558 = vadd.s32 %v524, %v547
        %v559 = vadd.s32 %v525, %v547
        %v560 = vadd.s32 %v526, %v547
        %v561 = vadd.s32 %v527, %v547
        %v562 = vadd.s32 %v528, %v547
        %v563 = vadd.s32 %v529, %v547
        %v564 = vadd.s32 %v530, %v547
        %v565 = vadd.s32 %v531, %v547
        %v566 = vadd.s32 %v532, %v547
        %v567 = vadd.s32 %v533, %v547
        %v568 = vadd.s32 %v534, %v547
        %v569 = vadd.s32 %v535, %v547
        %v570 = vadd.s32 %v536, %v547
        %v571 = vadd.s32 %v537, %v547
        %v572 = vadd.s32 %v538, %v547
        %v573 = vadd.s32 %v539, %v547
        %v574 = vadd.s32 %v540, %v547
        %v575 = vadd.s32 %v541, %v547
        %v576 = vadd.s32 %v542, %v547
        %v577 = vadd.s32 %v543, %v547
        %v578 = vadd.s32 %v544, %v547
        %v579 = vadd.s32 %v545, %v547
        %vm580 = vcmp.lt.s32.totalorder %v548, 392
        %vm581 = vcmp.lt.s32.totalorder %v549, 392
        %vm582 = vcmp.lt.s32.totalorder %v550, 392
        %vm583 = vcmp.lt.s32.totalorder %v551, 392
        %vm584 = vcmp.lt.s32.totalorder %v552, 392
        %vm585 = vcmp.lt.s32.totalorder %v553, 392
        %vm586 = vcmp.lt.s32.totalorder %v554, 392
        %vm587 = vcmp.lt.s32.totalorder %v555, 392
        %vm588 = vcmp.lt.s32.totalorder %v556, 392
        %vm589 = vcmp.lt.s32.totalorder %v557, 392
        %vm590 = vcmp.lt.s32.totalorder %v558, 392
        %vm591 = vcmp.lt.s32.totalorder %v559, 392
        %vm592 = vcmp.lt.s32.totalorder %v560, 392
        %vm593 = vcmp.lt.s32.totalorder %v561, 392
        %vm594 = vcmp.lt.s32.totalorder %v562, 392
        %vm595 = vcmp.lt.s32.totalorder %v563, 392
        %vm596 = vcmp.lt.s32.totalorder %v564, 392
        %vm597 = vcmp.lt.s32.totalorder %v565, 392
        %vm598 = vcmp.lt.s32.totalorder %v566, 392
        %vm599 = vcmp.lt.s32.totalorder %v567, 392
        %vm600 = vcmp.lt.s32.totalorder %v568, 392
        %vm601 = vcmp.lt.s32.totalorder %v569, 392
        %vm602 = vcmp.lt.s32.totalorder %v570, 392
        %vm603 = vcmp.lt.s32.totalorder %v571, 392
        %vm604 = vcmp.lt.s32.totalorder %v572, 392
        %vm605 = vcmp.lt.s32.totalorder %v573, 392
        %vm606 = vcmp.lt.s32.totalorder %v574, 392
        %vm607 = vcmp.lt.s32.totalorder %v575, 392
        %vm608 = vcmp.lt.s32.totalorder %v576, 392
        %vm609 = vcmp.lt.s32.totalorder %v577, 392
        %vm610 = vcmp.lt.s32.totalorder %v578, 392
        %vm611 = vcmp.lt.s32.totalorder %v579, 392
        %v612 = vsel %vm580, 1, 0
        %v613 = vsel %vm581, 1, 0
        %v614 = vsel %vm582, 1, 0
        %v615 = vsel %vm583, 1, 0
        %v616 = vsel %vm584, 1, 0
        %v617 = vsel %vm585, 1, 0
        %v618 = vsel %vm586, 1, 0
        %v619 = vsel %vm587, 1, 0
        %v620 = vsel %vm588, 1, 0
        %v621 = vsel %vm589, 1, 0
        %v622 = vsel %vm590, 1, 0
        %v623 = vsel %vm591, 1, 0
        %v624 = vsel %vm592, 1, 0
        %v625 = vsel %vm593, 1, 0
        %v626 = vsel %vm594, 1, 0
        %v627 = vsel %vm595, 1, 0
        %v628 = vsel %vm596, 1, 0
        %v629 = vsel %vm597, 1, 0
        %v630 = vsel %vm598, 1, 0
        %v631 = vsel %vm599, 1, 0
        %v632 = vsel %vm600, 1, 0
        %v633 = vsel %vm601, 1, 0
        %v634 = vsel %vm602, 1, 0
        %v635 = vsel %vm603, 1, 0
        %v636 = vsel %vm604, 1, 0
        %v637 = vsel %vm605, 1, 0
        %v638 = vsel %vm606, 1, 0
        %v639 = vsel %vm607, 1, 0
        %v640 = vsel %vm608, 1, 0
        %v641 = vsel %vm609, 1, 0
        %v642 = vsel %vm610, 1, 0
        %v643 = vsel %vm611, 1, 0
        %vm644 = vcmp.eq.s32.totalorder %v612, 1
        %vm645 = vcmp.eq.s32.totalorder %v613, 1
        %vm646 = vcmp.eq.s32.totalorder %v614, 1
        %vm647 = vcmp.eq.s32.totalorder %v615, 1
        %vm648 = vcmp.eq.s32.totalorder %v616, 1
        %vm649 = vcmp.eq.s32.totalorder %v617, 1
        %vm650 = vcmp.eq.s32.totalorder %v618, 1
        %vm651 = vcmp.eq.s32.totalorder %v619, 1
        %vm652 = vcmp.eq.s32.totalorder %v620, 1
        %vm653 = vcmp.eq.s32.totalorder %v621, 1
        %vm654 = vcmp.eq.s32.totalorder %v622, 1
        %vm655 = vcmp.eq.s32.totalorder %v623, 1
        %vm656 = vcmp.eq.s32.totalorder %v624, 1
        %vm657 = vcmp.eq.s32.totalorder %v625, 1
        %vm658 = vcmp.eq.s32.totalorder %v626, 1
        %vm659 = vcmp.eq.s32.totalorder %v627, 1
        %vm660 = vcmp.eq.s32.totalorder %v628, 1
        %vm661 = vcmp.eq.s32.totalorder %v629, 1
        %vm662 = vcmp.eq.s32.totalorder %v630, 1
        %vm663 = vcmp.eq.s32.totalorder %v631, 1
        %vm664 = vcmp.eq.s32.totalorder %v632, 1
        %vm665 = vcmp.eq.s32.totalorder %v633, 1
        %vm666 = vcmp.eq.s32.totalorder %v634, 1
        %vm667 = vcmp.eq.s32.totalorder %v635, 1
        %vm668 = vcmp.eq.s32.totalorder %v636, 1
        %vm669 = vcmp.eq.s32.totalorder %v637, 1
        %vm670 = vcmp.eq.s32.totalorder %v638, 1
        %vm671 = vcmp.eq.s32.totalorder %v639, 1
        %vm672 = vcmp.eq.s32.totalorder %v640, 1
        %vm673 = vcmp.eq.s32.totalorder %v641, 1
        %vm674 = vcmp.eq.s32.totalorder %v642, 1
        %vm675 = vcmp.eq.s32.totalorder %v643, 1
        %v676 = vsel %vm644, %v402, 0.0
        %v677 = vsel %vm645, %v404, 0.0
        %v678 = vsel %vm646, %v407, 0.0
        %v679 = vsel %vm647, %v409, 0.0
        %v680 = vsel %vm648, %v412, 0.0
        %v681 = vsel %vm649, %v414, 0.0
        %v682 = vsel %vm650, %v417, 0.0
        %v683 = vsel %vm651, %v419, 0.0
        %v684 = vsel %vm652, %v422, 0.0
        %v685 = vsel %vm653, %v424, 0.0
        %v686 = vsel %vm654, %v427, 0.0
        %v687 = vsel %vm655, %v429, 0.0
        %v688 = vsel %vm656, %v432, 0.0
        %v689 = vsel %vm657, %v434, 0.0
        %v690 = vsel %vm658, %v437, 0.0
        %v691 = vsel %vm659, %v439, 0.0
        %v692 = vsel %vm660, %v442, 0.0
        %v693 = vsel %vm661, %v444, 0.0
        %v694 = vsel %vm662, %v447, 0.0
        %v695 = vsel %vm663, %v449, 0.0
        %v696 = vsel %vm664, %v452, 0.0
        %v697 = vsel %vm665, %v454, 0.0
        %v698 = vsel %vm666, %v457, 0.0
        %v699 = vsel %vm667, %v459, 0.0
        %v700 = vsel %vm668, %v462, 0.0
        %v701 = vsel %vm669, %v464, 0.0
        %v702 = vsel %vm670, %v467, 0.0
        %v703 = vsel %vm671, %v469, 0.0
        %v704 = vsel %vm672, %v472, 0.0
        %v705 = vsel %vm673, %v474, 0.0
        %v706 = vsel %vm674, %v477, 0.0
        %v707 = vsel %vm675, %v479, 0.0
        %v708 = vadd.f32 %v676, %v677
        %v709 = vadd.f32 %v708, %v678
        %v710 = vadd.f32 %v709, %v679
        %v711 = vadd.f32 %v710, %v680
        %v712 = vadd.f32 %v711, %v681
        %v713 = vadd.f32 %v712, %v682
        %v714 = vadd.f32 %v713, %v683
        %v715 = vadd.f32 %v714, %v684
        %v716 = vadd.f32 %v715, %v685
        %v717 = vadd.f32 %v716, %v686
        %v718 = vadd.f32 %v717, %v687
        %v719 = vadd.f32 %v718, %v688
        %v720 = vadd.f32 %v719, %v689
        %v721 = vadd.f32 %v720, %v690
        %v722 = vadd.f32 %v721, %v691
        %v723 = vadd.f32 %v722, %v692
        %v724 = vadd.f32 %v723, %v693
        %v725 = vadd.f32 %v724, %v694
        %v726 = vadd.f32 %v725, %v695
        %v727 = vadd.f32 %v726, %v696
        %v728 = vadd.f32 %v727, %v697
        %v729 = vadd.f32 %v728, %v698
        %v730 = vadd.f32 %v729, %v699
        %v731 = vadd.f32 %v730, %v700
        %v732 = vadd.f32 %v731, %v701
        %v733 = vadd.f32 %v732, %v702
        %v734 = vadd.f32 %v733, %v703
        %v735 = vadd.f32 %v734, %v704
        %v736 = vadd.f32 %v735, %v705
        %v737 = vadd.f32 %v736, %v706
        %v738 = vadd.f32 %v737, %v707
        %v739 = vrot.slane %v738, 4
        %v740 = vadd.f32 %v738, %v739
        %v741 = vrot.slane %v740, 2
        %v742 = vadd.f32 %v740, %v741
        %v743 = vrot.slane %v742, 1
        %v744 = vadd.f32 %v742, %v743
        %745 = vst [vmem:[%s258] sm:$0x1] %v744
        %v746 = vmul.f32 %v676, %v676
        %v747 = vmul.f32 %v677, %v677
        %v748 = vmul.f32 %v678, %v678
        %v749 = vmul.f32 %v679, %v679
        %v750 = vmul.f32 %v680, %v680
        %v751 = vmul.f32 %v681, %v681
        %v752 = vmul.f32 %v682, %v682
        %v753 = vmul.f32 %v683, %v683
        %v754 = vmul.f32 %v684, %v684
        %v755 = vmul.f32 %v685, %v685
        %v756 = vmul.f32 %v686, %v686
        %v757 = vmul.f32 %v687, %v687
        %v758 = vmul.f32 %v688, %v688
        %v759 = vmul.f32 %v689, %v689
        %v760 = vmul.f32 %v690, %v690
        %v761 = vmul.f32 %v691, %v691
        %v762 = vmul.f32 %v692, %v692
        %v763 = vmul.f32 %v693, %v693
        %v764 = vmul.f32 %v694, %v694
        %v765 = vmul.f32 %v695, %v695
        %v766 = vmul.f32 %v696, %v696
        %v767 = vmul.f32 %v697, %v697
        %v768 = vmul.f32 %v698, %v698
        %v769 = vmul.f32 %v699, %v699
        %v770 = vmul.f32 %v700, %v700
        %v771 = vmul.f32 %v701, %v701
        %v772 = vmul.f32 %v702, %v702
        %v773 = vmul.f32 %v703, %v703
        %v774 = vmul.f32 %v704, %v704
        %v775 = vmul.f32 %v705, %v705
        %v776 = vmul.f32 %v706, %v706
        %v777 = vmul.f32 %v707, %v707
        %v778 = vadd.f32 %v746, %v747
        %v779 = vadd.f32 %v778, %v748
        %v780 = vadd.f32 %v779, %v749
        %v781 = vadd.f32 %v780, %v750
        %v782 = vadd.f32 %v781, %v751
        %v783 = vadd.f32 %v782, %v752
        %v784 = vadd.f32 %v783, %v753
        %v785 = vadd.f32 %v784, %v754
        %v786 = vadd.f32 %v785, %v755
        %v787 = vadd.f32 %v786, %v756
        %v788 = vadd.f32 %v787, %v757
        %v789 = vadd.f32 %v788, %v758
        %v790 = vadd.f32 %v789, %v759
        %v791 = vadd.f32 %v790, %v760
        %v792 = vadd.f32 %v791, %v761
        %v793 = vadd.f32 %v792, %v762
        %v794 = vadd.f32 %v793, %v763
        %v795 = vadd.f32 %v794, %v764
        %v796 = vadd.f32 %v795, %v765
        %v797 = vadd.f32 %v796, %v766
        %v798 = vadd.f32 %v797, %v767
        %v799 = vadd.f32 %v798, %v768
        %v800 = vadd.f32 %v799, %v769
        %v801 = vadd.f32 %v800, %v770
        %v802 = vadd.f32 %v801, %v771
        %v803 = vadd.f32 %v802, %v772
        %v804 = vadd.f32 %v803, %v773
        %v805 = vadd.f32 %v804, %v774
        %v806 = vadd.f32 %v805, %v775
        %v807 = vadd.f32 %v806, %v776
        %v808 = vadd.f32 %v807, %v777
        %v809 = vrot.slane %v808, 4
        %v810 = vadd.f32 %v808, %v809
        %v811 = vrot.slane %v810, 2
        %v812 = vadd.f32 %v810, %v811
        %v813 = vrot.slane %v812, 1
        %v814 = vadd.f32 %v812, %v813
        %815 = vst [vmem:[%s258 + $0x1] sm:$0x1] %v814
        %s816 = sand.u32 %s139, 1
        %s817 = scalar_lea.sflag [#allocation3], %s816
        %s818 = sand.u32 %s139, 1
        %s819 = smul.addr %s818, 256
        %s820 = scalar_lea.vmem [#allocation2], %s819
        %s821 = sand.u32 %s167, 1
        %s822 = scalar_lea.sflag [#allocation5], %s821
        %s823 = sand.u32 %s167, 1
        %s824 = smul.addr %s823, 2
        %s825 = scalar_lea.vmem [#allocation4], %s824
        // Predicated region
        $region37: #{tpu_custom_call.1} parent=35 // pred_check
          %p826 = pneg %p149
        $region38: #{tpu_custom_call.1} parent=35 // pred_check_branch
          %828 = sbr.rel (%p826) target = $region40
        $region39: #{tpu_custom_call.1} parent=35 // pred_region
          %s829 = smul.u32 32, %s27
          %831 = vsyncadd %s817, 0
          %s832 = sadd.s32 %s28, %s829
          %s833 = smul.addr %s832, 8
          %s834 = scalar_lea.hbm %s4, %s833
          %s835 = sshll.u32 %s820, 4
          %s836 = int_to_ptr.vmem [resolvable:$true] %s835
          %s837 = sshll.u32 %s834, 4
          %s838 = int_to_ptr.hbm [resolvable:$true] %s837
          %843 = dma.vmem_to_hbm [thread:$0]  %s836, 4096, %s838, %s817, 128, 128, 8
        $region40: #{tpu_custom_call.1} parent=35 // pred_fallthru
          _
        // Predicated region
        $region41: #{tpu_custom_call.1} parent=35 // pred_check
          %p844 = pneg %p177
        $region42: #{tpu_custom_call.1} parent=35 // pred_check_branch
          %846 = sbr.rel (%p844) target = $region44
        $region43: #{tpu_custom_call.1} parent=35 // pred_region
          %848 = vsyncadd %s822, 0
          %s849 = sadd.s32 %s28, %s27
          %s850 = smul.addr %s849, 2
          %s851 = scalar_lea.hbm %s5, %s850
          %s853 = sshll.u32 %s825, 4
          %s854 = int_to_ptr.vmem [resolvable:$true] %s853
          %s855 = sshll.u32 %s851, 4
          %s856 = int_to_ptr.hbm [resolvable:$true] %s855
          %858 = dma.vmem_to_hbm [thread:$0]  %s854, 32, %s856, %s822
        $region44: #{tpu_custom_call.1} parent=35 // pred_fallthru
          _
      $region36: #{tpu_custom_call.1} parent=5 // pred_fallthru
        _
      %p859 = scmp.le.s32.totalorder 2, %s18
      // Predicated region
      $region45: #{tpu_custom_call.1} parent=5 // pred_check
        %p860 = pneg %p859
      $region46: #{tpu_custom_call.1} parent=5 // pred_check_branch
        %862 = sbr.rel (%p860) target = $region48
      $region47: #{tpu_custom_call.1} parent=5 // pred_region
        %s863 = ssub.s32 %s18, 2
        // Predicated region
        $region49: #{tpu_custom_call.1} parent=47 // pred_check
          %p864 = pneg %p155
        $region50: #{tpu_custom_call.1} parent=47 // pred_check_branch
          %866 = sbr.rel (%p864) target = $region52
        $region51: #{tpu_custom_call.1} parent=47 // pred_region
          %s867 = sand.u32 %s140, 1
          %s868 = scalar_lea.sflag [#allocation3], %s867
          %s869 = sand.u32 %s140, 1
          %s870 = smul.addr %s869, 256
          %s871 = scalar_lea.vmem [#allocation2], %s870
          %873 = dma.done %s868, 4096
        $region52: #{tpu_custom_call.1} parent=47 // pred_fallthru
          _
        // Predicated region
        $region53: #{tpu_custom_call.1} parent=47 // pred_check
          %p874 = pneg %p183
        $region54: #{tpu_custom_call.1} parent=47 // pred_check_branch
          %876 = sbr.rel (%p874) target = $region56
        $region55: #{tpu_custom_call.1} parent=47 // pred_region
          %s877 = sand.u32 %s168, 1
          %s878 = scalar_lea.sflag [#allocation5], %s877
          %s879 = sand.u32 %s168, 1
          %s880 = smul.addr %s879, 2
          %s881 = scalar_lea.vmem [#allocation4], %s880
          %883 = dma.done %s878, 32
        $region56: #{tpu_custom_call.1} parent=47 // pred_fallthru
          _
      $region48: #{tpu_custom_call.1} parent=5 // pred_fallthru
        _
    $region6: #{tpu_custom_call.1} parent=1 // loop_footer
      %s22 = sadd.s32 1, %s18
    $region7: #{tpu_custom_call.1} parent=1 // loop_footer_branch
      %17 = sbr.rel target = $region3
    $region8: #{tpu_custom_call.1} parent=1 // loop_exit
      _
    %884 = vsyncpa [#allocation3], 1
    %s885 = scalar_lea.sflag [#allocation3], 1
    %886 = vsyncpa %s885, 1
    %887 = vsyncpa [#allocation5], 1
    %s888 = scalar_lea.sflag [#allocation5], 1
    %889 = vsyncpa %s888, 1

</llo_original>
